<compile_context>
chip_gen: v7x
topology: tpu7x:2x2x1
jax: 0.10.0
libtpu: 0.0.40
codegen_flags: <defaults>
</compile_context>

<pallas_src>
import jax
import jax.numpy as jnp
from jax.experimental import pallas as pl
from jax.experimental.pallas import tpu as pltpu


# ---------------------------------------------------------------------------
# kernels
# ---------------------------------------------------------------------------
def _linear_single_kernel(x_ref, w_ref, b_ref, o_ref):
    """Whole K reduction in one block: y = x @ W^T + b in a single step."""
    x = x_ref[...]
    w = w_ref[...]
    if x.dtype != w.dtype:            # static at trace time; in-VMEM VPU cast
        x = x.astype(w.dtype)
    o_ref[...] = (
        jnp.dot(x, w, preferred_element_type=jnp.float32) + b_ref[...]
    ).astype(o_ref.dtype)


def _linear_ktiled_f32_kernel(x_ref, w_ref, b_ref, o_ref):
    """K-tiled GEMM, f32 output: accumulate directly in the resident output
    block (no scratch); bias folded into the kk==0 init."""
    kk = pl.program_id(2)

    @pl.when(kk == 0)
    def _():
        o_ref[...] = jnp.broadcast_to(b_ref[...], o_ref.shape)

    x = x_ref[...]
    w = w_ref[...]
    if x.dtype != w.dtype:
        x = x.astype(w.dtype)
    o_ref[...] += jnp.dot(x, w, preferred_element_type=jnp.float32)


def _linear_ktiled_acc_kernel(x_ref, w_ref, b_ref, o_ref, acc_ref):
    """K-tiled GEMM, non-f32 output: accumulate in an f32 VMEM scratch and
    cast into the output block on the last K step."""
    kk = pl.program_id(2)

    @pl.when(kk == 0)
    def _():
        acc_ref[...] = jnp.broadcast_to(b_ref[...], acc_ref.shape)

    x = x_ref[...]
    w = w_ref[...]
    if x.dtype != w.dtype:
        x = x.astype(w.dtype)
    acc_ref[...] += jnp.dot(x, w, preferred_element_type=jnp.float32)

    @pl.when(kk == pl.num_programs(2) - 1)
    def _():
        o_ref[...] = acc_ref[...].astype(o_ref.dtype)


# ---------------------------------------------------------------------------
# tile / device helpers
# ---------------------------------------------------------------------------
def _sublane_multiple(dtype):
    """Sublane alignment for the M tile: 8 for f32, 16 for bf16, 32 for 8-bit."""
    bits = jnp.dtype(dtype).itemsize * 8
    return max(8, 256 // bits)


def _largest_aligned_divisor(dim, preferred, multiple):
    """Largest t <= preferred, multiple of `multiple`, dividing dim; None if none."""
    t = min(preferred, dim)
    t = (t // multiple) * multiple
    while t >= multiple:
        if dim % t == 0:
            return t
        t -= multiple
    return None


def _round_up(v, m):
    return ((v + m - 1) // m) * m


def _device_tile_defaults():
    """(tm, tn, tk, vmem_limit_bytes) tuned per VMEM capacity.

    128 MiB parts (v5e/v6e): tm=1024, tn=2048 -> ~22 MiB double-buffered
    working set, scoped limit raised to 96 MiB.
    64 MiB parts (v7x, and the safe fallback): tm=512, tn=2048 -> ~13 MiB,
    scoped limit 48 MiB (leaves slack on the 64 MiB part).
    """
    try:
        cap = getattr(pltpu.get_tpu_info(), "vmem_capacity_bytes", 64 << 20)
    except Exception:  # pragma: no cover - conservative fallback
        cap = 64 << 20
    if cap >= (128 << 20):
        return 1024, 2048, 512, 96 << 20
    return 512, 2048, 512, 48 << 20


# ---------------------------------------------------------------------------
# wrapper
# ---------------------------------------------------------------------------
def pallas_linear(x, w_t, b, *, tm=None, tn=None, tk=None,
                  vmem_limit_bytes=None, allow_xla_fallback=False):
    """y = x @ w_t + b, with w_t of shape (in_features, out_features).

    The MXU operand dtype is w_t's dtype (x tiles are cast in-kernel);
    accumulation is f32; the output dtype is x's dtype.
    """
    m, k = x.shape
    k2, n = w_t.shape
    assert k == k2, (x.shape, w_t.shape)
    assert b.shape[-1] == n
    out_dtype = x.dtype
    b2d = b.reshape(1, n).astype(jnp.float32)

    d_tm, d_tn, d_tk, d_vmem = _device_tile_defaults()
    tm = d_tm if tm is None else tm
    tn = d_tn if tn is None else tn
    tk = d_tk if tk is None else tk
    vmem_limit_bytes = d_vmem if vmem_limit_bytes is None else vmem_limit_bytes

    if allow_xla_fallback and (m * n * k) < (64 * 128 * 128):
        # Tiny problem: pure launch/DMA latency -- let XLA fuse a plain dot.
        return (jnp.dot(x.astype(w_t.dtype), w_t,
                        preferred_element_type=jnp.float32) + b2d).astype(out_dtype)

    # dtype-aware sublane alignment for the M tile (perf: avoids masked
    # partial stores for packed dtypes); lane alignment for N is always 128.
    sub = max(_sublane_multiple(x.dtype), _sublane_multiple(w_t.dtype),
              _sublane_multiple(out_dtype))
    tm = m if m <= tm else max(sub, (tm // sub) * sub)
    tn = n if n <= tn else max(128, (tn // 128) * 128)

    cost = pl.CostEstimate(
        flops=2 * m * n * k,
        transcendentals=0,
        bytes_accessed=(x.size * x.dtype.itemsize
                        + w_t.size * w_t.dtype.itemsize
                        + b2d.size * 4
                        + m * n * jnp.dtype(out_dtype).itemsize))

    if k <= tk:
        # Small-K fast path: no reduction grid axis, no scratch, no phases.
        gm, gn = pl.cdiv(m, tm), pl.cdiv(n, tn)
        return pl.pallas_call(
            _linear_single_kernel,
            out_shape=jax.ShapeDtypeStruct((m, n), out_dtype),
            grid_spec=pltpu.PrefetchScalarGridSpec(
                num_scalar_prefetch=0,
                grid=(gm, gn),
                in_specs=[
                    pl.BlockSpec((tm, k), lambda i, j: (i, 0)),   # x tile
                    pl.BlockSpec((k, tn), lambda i, j: (0, j)),   # W^T tile
                    pl.BlockSpec((1, tn), lambda i, j: (0, j)),   # bias
                ],
                out_specs=pl.BlockSpec((tm, tn), lambda i, j: (i, j)),
            ),
            compiler_params=pltpu.CompilerParams(
                dimension_semantics=("parallel", "parallel"),
                vmem_limit_bytes=vmem_limit_bytes),
            cost_estimate=cost,
        )(x, w_t, b2d)

    # --- K-tiled path -------------------------------------------------------
    # K must never be ragged (padding garbage would be accumulated into valid
    # outputs).  Prefer an aligned divisor; otherwise zero-pad K once.
    tk_div = _largest_aligned_divisor(k, tk, 128)
    if tk_div is None:
        kp = _round_up(k, 128)
        x = jnp.pad(x, ((0, 0), (0, kp - k)))
        w_t = jnp.pad(w_t, ((0, kp - k), (0, 0)))
        k = kp
        tk_div = _largest_aligned_divisor(k, tk, 128)
    tk = tk_div

    gm, gn, gk = pl.cdiv(m, tm), pl.cdiv(n, tn), k // tk

    # v7x megacore: ensure >= 2 parallel output blocks when K is the only
    # large axis, so both TensorCores get work (harmless on 1-TC parts).
    if gm * gn == 1 and gk > 1:
        if tn % 256 == 0:
            tn //= 2
        elif tm % (2 * sub) == 0:
            tm //= 2
        gm, gn = pl.cdiv(m, tm), pl.cdiv(n, tn)

    if out_dtype == jnp.float32:
        kernel = _linear_ktiled_f32_kernel
        scratch = []          # accumulate directly in the resident output
    else:
        kernel = _linear_ktiled_acc_kernel
        scratch = [pltpu.VMEM((tm, tn), jnp.float32)]

    # Accumulation invariant: K last grid axis, marked "arbitrary", output
    # index_map ignores kk.  Guard it explicitly.
    dim_sems = ("parallel", "parallel", "arbitrary")
    assert dim_sems[-1] == "arbitrary" and len(dim_sems) == 3

    # TODO(synk): if profiling on v5e shows exposed weight DMA for tiny-M
    # shapes, add pipeline_mode=pl.Buffered(3) on the W^T BlockSpec.
    return pl.pallas_call(
        kernel,
        out_shape=jax.ShapeDtypeStruct((m, n), out_dtype),
        grid_spec=pltpu.PrefetchScalarGridSpec(
            num_scalar_prefetch=0,
            grid=(gm, gn, gk),
            in_specs=[
                pl.BlockSpec((tm, tk), lambda i, j, kk: (i, kk)),  # x tile
                pl.BlockSpec((tk, tn), lambda i, j, kk: (kk, j)),  # W^T tile
                pl.BlockSpec((1, tn), lambda i, j, kk: (0, j)),    # bias
            ],
            out_specs=pl.BlockSpec((tm, tn), lambda i, j, kk: (i, j)),
            scratch_shapes=scratch,
        ),
        compiler_params=pltpu.CompilerParams(
            dimension_semantics=dim_sems,
            vmem_limit_bytes=vmem_limit_bytes),
        cost_estimate=cost,
    )(x, w_t, b2d)


# ---------------------------------------------------------------------------
# module
# ---------------------------------------------------------------------------
class PiecewiseLinearAttributor:
    """JAX mirror of the PyTorch module: records the input, returns Linear(x).

    compute_dtype (default bf16): dtype of the cached MXU weight copy; x tiles
    are cast to it inside the kernel and accumulation stays f32, so results
    match a torch f32 Linear up to bf16 rounding.  Pass compute_dtype=None for
    a pure-f32 path.
    """

    def __init__(self, in_features, out_features, key, compute_dtype=jnp.bfloat16):
        kw, kb = jax.random.split(key)
        # torch.nn.Linear default init: U(-1/sqrt(in), 1/sqrt(in))
        bound = 1.0 / (in_features ** 0.5)
        # weight in torch layout (out, in); keep an MXU-ready transposed copy.
        self.weight = jax.random.uniform(
            kw, (out_features, in_features), jnp.float32, -bound, bound
        )
        self.bias = jax.random.uniform(
            kb, (out_features,), jnp.float32, -bound, bound
        )
        self._w_t = jnp.asarray(self.weight.T)  # (in_features, out_features)
        # Cached MXU-operand weight copy: the cast happens ONCE here, never
        # per forward (per-call astype = a full extra HBM pass over W).
        if compute_dtype is not None and jnp.dtype(compute_dtype) != self._w_t.dtype:
            self._w_t_compute = self._w_t.astype(compute_dtype)
        else:
            self._w_t_compute = self._w_t
        self._compute_dtype = compute_dtype
        self._in = None

    def __call__(self, x):
        self._in = x  # mirrors `self._in = x` in the torch forward
        return pallas_linear(x, self._w_t_compute, self.bias)

    def attribution(self, out):
        # TODO(synk): piecewise-linear attribution uses autograd w.r.t. the
        # recorded input; it is not part of the forward pass implemented here.
        raise NotImplementedError


if __name__ == "__main__":
    key = jax.random.PRNGKey(0)
    k_x, k_p, k_x2 = jax.random.split(key, 3)

    batch, in_features, out_features = 8, 256, 128
    x = jax.random.normal(k_x, (batch, in_features), dtype=jnp.float32)

    # 1) default module: bf16 MXU operands (cached weight cast), f32 output,
    #    single-step kernel path (grid (1,1), no scratch / phases).
    module = PiecewiseLinearAttributor(in_features, out_features, k_p)
    y_ref = x @ module.weight.T + module.bias  # plain-JAX f32 reference
    y = jax.block_until_ready(module(x))
    assert y.shape == (batch, out_features)
    assert module._in is x
    assert jnp.allclose(y, y_ref, atol=5e-2, rtol=5e-2), "bf16 default path"

    # 2) pure f32 path (compute_dtype=None) -> tight tolerance
    module_f32 = PiecewiseLinearAttributor(
        in_features, out_features, k_p, compute_dtype=None
    )
    y_f32 = jax.block_until_ready(module_f32(x))
    assert jnp.allclose(y_f32, y_ref, atol=1e-4, rtol=1e-4), "f32 path"

    # 3) force the K-tiled path (tk=128 -> 2 K steps, f32 accumulation
    #    directly in the resident output block, bias folded into init)
    y_kt = jax.block_until_ready(
        pallas_linear(x, module_f32._w_t, module_f32.bias, tk=128)
    )
    assert jnp.allclose(y_kt, y_ref, atol=1e-4, rtol=1e-4), "K-tiled f32 path"

    # 4) bf16 in / bf16 out exercises the scratch-accumulator K-tiled kernel
    y_b = jax.block_until_ready(
        pallas_linear(x.astype(jnp.bfloat16), module._w_t_compute,
                      module.bias, tk=128)
    )
    assert y_b.dtype == jnp.bfloat16
    assert jnp.allclose(y_b.astype(jnp.float32), y_ref, atol=5e-2, rtol=5e-2), \
        "K-tiled bf16 scratch path"

    # 5) ragged M via cdiv grid (masked last block) + K-tiled f32 path
    m2, k2d, n2 = 72, 256, 384
    x2 = jax.random.normal(k_x2, (m2, k2d), dtype=jnp.float32)
    kw2, kb2 = jax.random.split(jax.random.PRNGKey(1))
    w2 = jax.random.uniform(kw2, (k2d, n2), jnp.float32, -0.05, 0.05)
    b2 = jax.random.uniform(kb2, (n2,), jnp.float32, -0.05, 0.05)
    y2 = jax.block_until_ready(pallas_linear(x2, w2, b2, tm=32, tn=128, tk=128))
    y2_ref = x2 @ w2 + b2
    assert jnp.allclose(y2, y2_ref, atol=2e-3, rtol=2e-3), "ragged-M path"

    print("KERNEL_OK")
</pallas_src>

<mosaic_0001>
module attributes {stable_mosaic.version = 11 : i64} {
  func.func @_linear_single_kernel(%arg0: i32, %arg1: i32, %arg2: memref<8x256xf32, #tpu.memory_space<vmem>>, %arg3: memref<256x128xbf16, #tpu.memory_space<vmem>>, %arg4: memref<1x128xf32, #tpu.memory_space<vmem>>, %arg5: memref<8x128xf32, #tpu.memory_space<vmem>>) attributes {dimension_semantics = [#tpu.dimension_semantics<parallel>, #tpu.dimension_semantics<parallel>], iteration_bounds = array<i64: 1, 1>, scalar_prefetch = 0 : i64, scratch_operands = 0 : i64, tpu.core_type = #tpu.core_type<tc>, window_params = [{transform_indices = @transform_0, window_bounds = array<i64: 8, 256>}, {transform_indices = @transform_1, window_bounds = array<i64: 256, 128>}, {transform_indices = @transform_2, window_bounds = array<i64: 1, 128>}, {transform_indices = @transform_3, window_bounds = array<i64: 8, 128>}]} {
    %c0 = arith.constant 0 : index
    %c0_0 = arith.constant 0 : index
    %0 = vector.load %arg2[%c0, %c0_0] : memref<8x256xf32, #tpu.memory_space<vmem>>, vector<8x256xf32>
    %c0_1 = arith.constant 0 : index
    %c0_2 = arith.constant 0 : index
    %1 = vector.load %arg3[%c0_1, %c0_2] : memref<256x128xbf16, #tpu.memory_space<vmem>>, vector<256x128xbf16>
    %2 = arith.truncf %0 : vector<8x256xf32> to vector<8x256xbf16>
    %cst = arith.constant dense<0.000000e+00> : vector<8x128xf32>
    %3 = tpu.matmul %2, %1, %cst {dimension_numbers = #tpu.dot_dimension_numbers<[1], [0], [0], [1], [0, 0, 1, 1], [], []>} : vector<8x256xbf16>, vector<256x128xbf16>, vector<8x128xf32> -> vector<8x128xf32>
    %c0_3 = arith.constant 0 : index
    %c0_4 = arith.constant 0 : index
    %4 = vector.load %arg4[%c0_3, %c0_4] : memref<1x128xf32, #tpu.memory_space<vmem>>, vector<1x128xf32>
    %5 = vector.broadcast %4 : vector<1x128xf32> to vector<8x128xf32>
    %6 = arith.addf %3, %5 : vector<8x128xf32>
    %c0_5 = arith.constant 0 : index
    %c0_6 = arith.constant 0 : index
    %7 = vector.load %arg5[%c0_5, %c0_6] : memref<8x128xf32, #tpu.memory_space<vmem>>, vector<8x128xf32>
    tpu.vector_store %arg5[%c0_5, %c0_6], %6 {strides = array<i32>} : memref<8x128xf32, #tpu.memory_space<vmem>>, vector<8x128xf32>,
    return
  }
  func.func @transform_0(%arg0: i32, %arg1: i32) -> (i32, i32) {
    %c0_i32 = arith.constant 0 : i32
    %c0_i32_0 = arith.constant 0 : i32
    return %arg0, %c0_i32 : i32, i32
  }
  func.func @transform_1(%arg0: i32, %arg1: i32) -> (i32, i32) {
    %c0_i32 = arith.constant 0 : i32
    %c0_i32_0 = arith.constant 0 : i32
    return %c0_i32, %arg1 : i32, i32
  }
  func.func @transform_2(%arg0: i32, %arg1: i32) -> (i32, i32) {
    %c0_i32 = arith.constant 0 : i32
    %c0_i32_0 = arith.constant 0 : i32
    return %c0_i32, %arg1 : i32, i32
  }
  func.func @transform_3(%arg0: i32, %arg1: i32) -> (i32, i32) {
    %c0_i32 = arith.constant 0 : i32
    return %arg0, %arg1 : i32, i32
  }
}

</mosaic_0001>

<llo_original>
// kernel: tpu_custom_call.1
$region0: #{tpu_custom_call.1}
  #allocation0 [shape = 'u32[]', space=smem, size = 0x4, offset = 0x4, fixed_abs, tag = 'smem constant byte address 0x4 - core index']
  #allocation1 [shape = 'u32[144,128]{1,0:T(1,128)}', space=vmem, size = 0x12000, scoped, tag = 'internal scratch']
  %s0 = inlined_call_operand.hbm [shape: f32[8,256], index: 0, kind: input, shape index: {}]
  %s1 = inlined_call_operand.hbm [shape: bf16[256,128], index: 1, kind: input, shape index: {}]
  %s2 = inlined_call_operand.vmem [shape: f32[1,128], index: 2, kind: input, shape index: {}]
  %s3 = inlined_call_operand.hbm [shape: f32[8,128], index: 3, kind: output, shape index: {}]
  %s4 = sld [smem:[#allocation0]]
  $region30: #{tpu_custom_call.1} parent=0
    _
  %s6 = ssub.s32 1, %s4
  %s7 = scalar_select 0, %s6, %s4
  $region1: #{tpu_custom_call.1} parent=0
    #allocation2 [shape = 'u8[8192]{0}', space=vmem, size = 0x2000, scoped, tag = 'input window, operand 0, single buffered']
    #allocation3 [shape = 's32[1]{0}', space=sflag, size = 0x4, scoped, tag = 'scoped memory for tpu_custom_call.1']
    #allocation4 [shape = 's32[1]{0}', space=sflag, size = 0x4, scoped, tag = 'scoped memory for tpu_custom_call.1']
    #allocation5 [shape = 'u8[65536]{0}', space=vmem, size = 0x10000, scoped, tag = 'input window, operand 1, single buffered']
    #allocation6 [shape = 's32[1]{0}', space=sflag, size = 0x4, scoped, tag = 'scoped memory for tpu_custom_call.1']
    #allocation7 [shape = 'u8[4096]{0}', space=vmem, size = 0x1000, scoped, tag = 'output window, operand 0, single buffered']
    %8 = vsyncpa [#allocation3], 0
    %9 = vsyncpa [#allocation6], 0
    %10 = vsyncpa [#allocation4], 0
    // Predicated region
    $region2: #{tpu_custom_call.1} parent=1 // pred_check
      _
    $region3: #{tpu_custom_call.1} parent=1 // pred_check_branch
      %12 = sbr.rel (0) target = $region5
    $region4: #{tpu_custom_call.1} parent=1 // pred_region
      %s14 = ssub.s32 256, 256
      %15 = vsyncadd [#allocation3], %s14
      %s17 = sshll.u32 [#allocation2], 4
      %s18 = int_to_ptr.vmem [resolvable:$true] %s17
      %20 = dma.hbm_to_vmem [thread:$0]  %s0, 256, %s18, [#allocation3]
    $region5: #{tpu_custom_call.1} parent=1 // pred_fallthru
      _
    // Predicated region
    $region6: #{tpu_custom_call.1} parent=1 // pred_check
      _
    $region7: #{tpu_custom_call.1} parent=1 // pred_check_branch
      %22 = sbr.rel (0) target = $region9
    $region8: #{tpu_custom_call.1} parent=1 // pred_region
      %s24 = ssub.s32 2048, 2048
      %25 = vsyncadd [#allocation6], %s24
      %s26 = sshll.u32 [#allocation5], 4
      %s27 = int_to_ptr.vmem [resolvable:$true] %s26
      %32 = dma.hbm_to_vmem [thread:$0]  %s1, 2048, %s27, [#allocation6], 64, 64, 4
    $region9: #{tpu_custom_call.1} parent=1 // pred_fallthru
      _
    // Predicated region
    $region10: #{tpu_custom_call.1} parent=1 // pred_check
      _
    $region11: #{tpu_custom_call.1} parent=1 // pred_check_branch
      %34 = sbr.rel (0) target = $region13
    $region12: #{tpu_custom_call.1} parent=1 // pred_region
      _
    $region13: #{tpu_custom_call.1} parent=1 // pred_fallthru
      _
    // Predicated region
    $region14: #{tpu_custom_call.1} parent=1 // pred_check
      _
    $region15: #{tpu_custom_call.1} parent=1 // pred_check_branch
      %36 = sbr.rel (0) target = $region17
    $region16: #{tpu_custom_call.1} parent=1 // pred_region
      %37 = dma.done [#allocation3], 256
    $region17: #{tpu_custom_call.1} parent=1 // pred_fallthru
      _
    // Predicated region
    $region18: #{tpu_custom_call.1} parent=1 // pred_check
      _
    $region19: #{tpu_custom_call.1} parent=1 // pred_check_branch
      %39 = sbr.rel (0) target = $region21
    $region20: #{tpu_custom_call.1} parent=1 // pred_region
      %40 = dma.done [#allocation6], 2048
    $region21: #{tpu_custom_call.1} parent=1 // pred_fallthru
      _
    %v42 = vld [vmem:[#allocation2] sm:$0xff]
    %v43 = vld [vmem:[#allocation2 + $0x8] sm:$0xff]
    %v44 = vld [vmem:[#allocation5] sm:$0xf]
    %v45 = vld [vmem:[#allocation5 + $0x4] sm:$0xf]
    %v46 = vld [vmem:[#allocation5 + $0x8] sm:$0xf]
    %v47 = vld [vmem:[#allocation5 + $0xc] sm:$0xf]
    %v48 = vld [vmem:[#allocation5 + $0x10] sm:$0xf]
    %v49 = vld [vmem:[#allocation5 + $0x14] sm:$0xf]
    %v50 = vld [vmem:[#allocation5 + $0x18] sm:$0xf]
    %v51 = vld [vmem:[#allocation5 + $0x1c] sm:$0xf]
    %v52 = vld [vmem:[#allocation5 + $0x20] sm:$0xf]
    %v53 = vld [vmem:[#allocation5 + $0x24] sm:$0xf]
    %v54 = vld [vmem:[#allocation5 + $0x28] sm:$0xf]
    %v55 = vld [vmem:[#allocation5 + $0x2c] sm:$0xf]
    %v56 = vld [vmem:[#allocation5 + $0x30] sm:$0xf]
    %v57 = vld [vmem:[#allocation5 + $0x34] sm:$0xf]
    %v58 = vld [vmem:[#allocation5 + $0x38] sm:$0xf]
    %v59 = vld [vmem:[#allocation5 + $0x3c] sm:$0xf]
    %v60 = vld [vmem:[#allocation5 + $0x40] sm:$0xf]
    %v61 = vld [vmem:[#allocation5 + $0x44] sm:$0xf]
    %v62 = vld [vmem:[#allocation5 + $0x48] sm:$0xf]
    %v63 = vld [vmem:[#allocation5 + $0x4c] sm:$0xf]
    %v64 = vld [vmem:[#allocation5 + $0x50] sm:$0xf]
    %v65 = vld [vmem:[#allocation5 + $0x54] sm:$0xf]
    %v66 = vld [vmem:[#allocation5 + $0x58] sm:$0xf]
    %v67 = vld [vmem:[#allocation5 + $0x5c] sm:$0xf]
    %v68 = vld [vmem:[#allocation5 + $0x60] sm:$0xf]
    %v69 = vld [vmem:[#allocation5 + $0x64] sm:$0xf]
    %v70 = vld [vmem:[#allocation5 + $0x68] sm:$0xf]
    %v71 = vld [vmem:[#allocation5 + $0x6c] sm:$0xf]
    %v72 = vld [vmem:[#allocation5 + $0x70] sm:$0xf]
    %v73 = vld [vmem:[#allocation5 + $0x74] sm:$0xf]
    %v74 = vld [vmem:[#allocation5 + $0x78] sm:$0xf]
    %v75 = vld [vmem:[#allocation5 + $0x7c] sm:$0xf]
    %v76 = vpack.c.bf16 %v42, %v42
    %v77 = vpack.c.bf16 %v43, %v43
    %v78 = vld [vmem:[%s2] sm:$0x1]
    %v80 = vlaneseq
    %v81 = vshrl.u32 %v80, 7
    %v82 = vsub.s32 0, %v81
    %v83 = vrot.slane %v78, %v82
    %v117 = vunpack.c.l.b16 %v44
    %v118 = vunpack.c.l.b16 %v45
    %v119 = vunpack.c.l.b16 %v46
    %v120 = vunpack.c.l.b16 %v47
    %v121 = vunpack.c.l.b16 %v48
    %v122 = vunpack.c.l.b16 %v49
    %v123 = vunpack.c.l.b16 %v50
    %v124 = vunpack.c.l.b16 %v51
    %v125 = vunpack.c.l.b16 %v52
    %v126 = vunpack.c.l.b16 %v53
    %v127 = vunpack.c.l.b16 %v54
    %v128 = vunpack.c.l.b16 %v55
    %v129 = vunpack.c.l.b16 %v56
    %v130 = vunpack.c.l.b16 %v57
    %v131 = vunpack.c.l.b16 %v58
    %v132 = vunpack.c.l.b16 %v59
    %v133 = vunpack.c.l.b16 %v60
    %v134 = vunpack.c.l.b16 %v61
    %v135 = vunpack.c.l.b16 %v62
    %v136 = vunpack.c.l.b16 %v63
    %v137 = vunpack.c.l.b16 %v64
    %v138 = vunpack.c.l.b16 %v65
    %v139 = vunpack.c.l.b16 %v66
    %v140 = vunpack.c.l.b16 %v67
    %v141 = vunpack.c.l.b16 %v68
    %v142 = vunpack.c.l.b16 %v69
    %v143 = vunpack.c.l.b16 %v70
    %v144 = vunpack.c.l.b16 %v71
    %v145 = vunpack.c.l.b16 %v72
    %v146 = vunpack.c.l.b16 %v73
    %v147 = vunpack.c.l.b16 %v74
    %v148 = vunpack.c.l.b16 %v75
    %v149 = vpack.c.b16 %v118, %v117
    %v150 = vpack.c.b16 %v120, %v119
    %v151 = vpack.c.b16 %v122, %v121
    %v152 = vpack.c.b16 %v124, %v123
    %v153 = vpack.c.b16 %v126, %v125
    %v154 = vpack.c.b16 %v128, %v127
    %v155 = vpack.c.b16 %v130, %v129
    %v156 = vpack.c.b16 %v132, %v131
    %v157 = vpack.c.b16 %v134, %v133
    %v158 = vpack.c.b16 %v136, %v135
    %v159 = vpack.c.b16 %v138, %v137
    %v160 = vpack.c.b16 %v140, %v139
    %v161 = vpack.c.b16 %v142, %v141
    %v162 = vpack.c.b16 %v144, %v143
    %v163 = vpack.c.b16 %v146, %v145
    %v164 = vpack.c.b16 %v148, %v147
    %181 = vmatprep.subr.bf16.mxu0 0
    %182 = vmatpush1.bf16.msra.mxu0 %v149
    %183 = vmatprep.subr.bf16.mxu0 0
    %184 = vmatpush1.bf16.msra.mxu0 %v150
    %185 = vmatprep.subr.bf16.mxu0 0
    %186 = vmatpush1.bf16.msra.mxu0 %v151
    %187 = vmatprep.subr.bf16.mxu0 0
    %188 = vmatpush1.bf16.msra.mxu0 %v152
    %189 = vmatprep.subr.bf16.mxu0 0
    %190 = vmatpush1.bf16.msra.mxu0 %v153
    %191 = vmatprep.subr.bf16.mxu0 0
    %192 = vmatpush1.bf16.msra.mxu0 %v154
    %193 = vmatprep.subr.bf16.mxu0 0
    %194 = vmatpush1.bf16.msra.mxu0 %v155
    %195 = vmatprep.subr.bf16.mxu0 0
    %196 = vmatpush1.bf16.msra.mxu0 %v156
    %197 = vmatprep.subr.bf16.mxu0 0
    %198 = vmatpush1.bf16.msra.mxu0 %v157
    %199 = vmatprep.subr.bf16.mxu0 0
    %200 = vmatpush1.bf16.msra.mxu0 %v158
    %201 = vmatprep.subr.bf16.mxu0 0
    %202 = vmatpush1.bf16.msra.mxu0 %v159
    %203 = vmatprep.subr.bf16.mxu0 0
    %204 = vmatpush1.bf16.msra.mxu0 %v160
    %205 = vmatprep.subr.bf16.mxu0 0
    %206 = vmatpush1.bf16.msra.mxu0 %v161
    %207 = vmatprep.subr.bf16.mxu0 0
    %208 = vmatpush1.bf16.msra.mxu0 %v162
    %209 = vmatprep.subr.bf16.mxu0 0
    %210 = vmatpush1.bf16.msra.mxu0 %v163
    %211 = vmatprep.subr.bf16.mxu0 0
    %212 = vmatpush1.bf16.msra.mxu0 %v164
    %213 = vmatprep.mubr.bf16.mxu0 %v77
    %214 = vmatmul.mubr.bf16.gmra.mrb[0].mxu0 %v76
    %v215 = vpop.f32.mrb[0].mxu0
    %v216 = vadd.f32 %v83, %v215
    %v217 = vpop.f32.mrb[0].mxu0
    %v218 = vpop.f32.mrb[0].mxu0
    %v219 = vpop.f32.mrb[0].mxu0
    %220 = vdwg.mxu0
    %221 = vst [vmem:[#allocation7] sm:$0xff] %v216
    // Predicated region
    $region22: #{tpu_custom_call.1} parent=1 // pred_check
      _
    $region23: #{tpu_custom_call.1} parent=1 // pred_check_branch
      %223 = sbr.rel (0) target = $region25
    $region24: #{tpu_custom_call.1} parent=1 // pred_region
      %s225 = ssub.s32 128, 128
      %226 = vsyncadd [#allocation4], %s225
      %s228 = sshll.u32 [#allocation7], 4
      %s229 = int_to_ptr.vmem [resolvable:$true] %s228
      %231 = dma.vmem_to_hbm [thread:$0]  %s229, 128, %s3, [#allocation4]
    $region25: #{tpu_custom_call.1} parent=1 // pred_fallthru
      _
    // Predicated region
    $region26: #{tpu_custom_call.1} parent=1 // pred_check
      _
    $region27: #{tpu_custom_call.1} parent=1 // pred_check_branch
      %233 = sbr.rel (0) target = $region29
    $region28: #{tpu_custom_call.1} parent=1 // pred_region
      %234 = dma.done [#allocation4], 128
    $region29: #{tpu_custom_call.1} parent=1 // pred_fallthru
      _
    %235 = vsyncpa [#allocation3], 1
    %236 = vsyncpa [#allocation6], 1
    %237 = vsyncpa [#allocation4], 1

</llo_original>
